<compile_context>
chip_gen: v6e
topology: v6e:2x2x1
jax: 0.10.0
libtpu: 0.0.40
codegen_flags: <defaults>
</compile_context>

<pallas_src>
import jax
import jax.numpy as jnp
from jax.experimental import pallas as pl
from jax.experimental.pallas import tpu as pltpu

_LANE = 128
_SUBLANE = 8
# Pad value for the ||b||^2 row of padded B columns: big enough to never win the
# min, finite so no inf flows through the MXU.
_BIG = jnp.float32(1e30)


def _round_up(x, m):
    return (x + m - 1) // m * m


def _one_sided_min_kernel(a_ref, asq_ref, b_ref, out_ref, acc_ref):
    # a_ref  : (tn, 4)   rows [x, y, z, 1] of cloud A                    (VMEM)
    # asq_ref: (tn, 1)   ||a||^2 per A point                             (VMEM)
    # b_ref  : (4, tm)   lane-dense [-2x; -2y; -2z; ||b||^2] of cloud B  (VMEM)
    # out_ref: (tn, 1)   min Euclidean distance per A point (written at j==last)
    # acc_ref: (tn, 128) running elementwise-min of partial squared distances
    j = pl.program_id(1)

    @pl.when(j == 0)
    def _init():
        acc_ref[...] = jnp.full_like(acc_ref, jnp.inf)

    # MXU: (tn, 4) @ (4, tm) -> (tn, tm) = ||b_j||^2 - 2<a_i, b_j>
    part = jnp.dot(
        a_ref[...],
        b_ref[...],
        preferred_element_type=jnp.float32,
        precision=jax.lax.Precision.HIGHEST,
    )

    # Fold the tile's 128-lane slabs into the running minimum.  Pure VALU work;
    # no cross-lane (XLU) reduce until finalisation.  Static unroll: slab count
    # is tm/128 (<= 16 with default tiles), and slices sit on lane-aligned
    # 128-boundaries, so no relayout copies.
    acc = acc_ref[...]
    tm = part.shape[1]
    for s in range(tm // _LANE):
        acc = jnp.minimum(acc, part[:, s * _LANE:(s + 1) * _LANE])
    acc_ref[...] = acc

    @pl.when(j == pl.num_programs(1) - 1)
    def _finalize():
        # One XLU reduce per N-tile, add ||a_i||^2, clamp tiny FP negatives,
        # and take the only sqrts in the kernel (tn of them, on the EUP).
        row_min = jnp.min(acc_ref[...], axis=1, keepdims=True)   # (tn, 1)
        d2 = jnp.maximum(row_min + asq_ref[...], 0.0)
        out_ref[...] = jnp.sqrt(d2)


def _one_sided_min_dists(a, b, *, tn, tm):
    """For each point of `a` (N,3): Euclidean distance to nearest point of `b` (M,3)."""
    n = a.shape[0]
    m = b.shape[0]
    a = a.astype(jnp.float32)
    b = b.astype(jnp.float32)

    tn = min(tn, _round_up(n, _SUBLANE))      # multiple of 8
    tm = min(tm, _round_up(m, _LANE))         # multiple of 128
    n_pad = _round_up(n, tn)
    m_pad = _round_up(m, tm)

    # A side: augmented rows [x, y, z, 1] plus per-point squared norms.
    asq = jnp.sum(a * a, axis=1, keepdims=True)                           # (n, 1)
    a_aug = jnp.concatenate([a, jnp.ones((n, 1), jnp.float32)], axis=1)   # (n, 4)
    a_aug = jnp.pad(a_aug, ((0, n_pad - n), (0, 0)))
    asq = jnp.pad(asq, ((0, n_pad - n), (0, 0)))

    # B side, lane-dense (4, m_pad): [-2x; -2y; -2z; ||b||^2].  Padded columns
    # get coordinates 0 and a huge "norm" so they can never win the min.
    b_pad = jnp.pad(b, ((0, m_pad - m), (0, 0)))                          # (m_pad, 3)
    bsq = jnp.sum(b_pad * b_pad, axis=1, keepdims=True)                   # (m_pad, 1)
    if m_pad > m:
        bsq = bsq.at[m:, :].set(_BIG)
    b_aug = jnp.concatenate([-2.0 * b_pad, bsq], axis=1).T                # (4, m_pad)

    grid = (n_pad // tn, m_pad // tm)

    out = pl.pallas_call(
        _one_sided_min_kernel,
        out_shape=jax.ShapeDtypeStruct((n_pad, 1), jnp.float32),
        grid_spec=pltpu.PrefetchScalarGridSpec(
            num_scalar_prefetch=0,
            grid=grid,
            in_specs=[
                pl.BlockSpec((tn, 4), lambda i, j: (i, 0)),    # A tile (resident over j)
                pl.BlockSpec((tn, 1), lambda i, j: (i, 0)),    # ||a||^2 tile
                pl.BlockSpec((4, tm), lambda i, j: (0, j)),    # B tile (reduction axis)
            ],
            out_specs=pl.BlockSpec((tn, 1), lambda i, j: (i, 0)),
            scratch_shapes=[pltpu.VMEM((tn, _LANE), jnp.float32)],
        ),
        compiler_params=pltpu.CompilerParams(
            dimension_semantics=("parallel", "arbitrary"),
        ),
    )(a_aug, asq, b_aug)

    return out[:n, 0]


def chamfer_distance(points1, points2, *, tn=1024, tm=2048):
    """points1: (N, 3), points2: (M, 3) -> scalar Chamfer distance (float32)."""
    d12 = _one_sided_min_dists(points1, points2, tn=tn, tm=tm)   # (N,)
    d21 = _one_sided_min_dists(points2, points1, tn=tn, tm=tm)   # (M,)
    return jnp.sum(d12) + jnp.sum(d21)


def _chamfer_reference(points1, points2):
    # Pure-JAX reference matching torch semantics exactly.
    diff = points1[:, None, :] - points2[None, :, :]
    d = jnp.sqrt(jnp.maximum(jnp.sum(diff * diff, axis=-1), 0.0))
    return jnp.sum(jnp.min(d, axis=1)) + jnp.sum(jnp.min(d, axis=0))


if __name__ == "__main__":
    key = jax.random.PRNGKey(0)
    k1, k2 = jax.random.split(key)
    N, M = 100, 150   # small clouds, non-multiples of tiles -> exercises padding
    points1 = jax.random.normal(k1, (N, 3), dtype=jnp.float32)
    points2 = jax.random.normal(k2, (M, 3), dtype=jnp.float32)

    ref = jax.block_until_ready(_chamfer_reference(points1, points2))

    # Default (large) tiles: single grid step per call.
    res_default = jax.block_until_ready(chamfer_distance(points1, points2))
    # Small tiles: multi-tile grid exercising the running-min accumulator,
    # pl.when init/finalise path and tail-tile padding.
    res_tiled = jax.block_until_ready(
        chamfer_distance(points1, points2, tn=32, tm=128))

    assert jnp.allclose(res_default, ref, rtol=1e-2, atol=1e-2), (res_default, ref)
    assert jnp.allclose(res_tiled, ref, rtol=1e-2, atol=1e-2), (res_tiled, ref)

    print("KERNEL_OK")
</pallas_src>

<mosaic_0001>
module attributes {stable_mosaic.version = 11 : i64} {
  func.func @_one_sided_min_kernel(%arg0: i32, %arg1: i32, %arg2: memref<104x4xf32, #tpu.memory_space<vmem>>, %arg3: memref<104x1xf32, #tpu.memory_space<vmem>>, %arg4: memref<4x256xf32, #tpu.memory_space<vmem>>, %arg5: memref<104x1xf32, #tpu.memory_space<vmem>>, %arg6: memref<104x128xf32, #tpu.memory_space<vmem>>) attributes {dimension_semantics = [#tpu.dimension_semantics<parallel>, #tpu.dimension_semantics<arbitrary>], iteration_bounds = array<i64: 1, 1>, scalar_prefetch = 0 : i64, scratch_operands = 1 : i64, tpu.core_type = #tpu.core_type<tc>, window_params = [{transform_indices = @transform_0, window_bounds = array<i64: 104, 4>}, {transform_indices = @transform_1, window_bounds = array<i64: 104, 1>}, {transform_indices = @transform_2, window_bounds = array<i64: 4, 256>}, {transform_indices = @transform_3, window_bounds = array<i64: 104, 1>}]} {
    %c0_i32 = arith.constant 0 : i32
    %0 = arith.cmpi eq, %arg1, %c0_i32 : i32
    %1 = arith.extui %0 : i1 to i32
    %c0_i32_0 = arith.constant 0 : i32
    %2 = arith.cmpi ne, %1, %c0_i32_0 : i32
    scf.if %2 {
      %cst_10 = arith.constant 0x7F800000 : f32
      %15 = vector.broadcast %cst_10 : f32 to vector<104x128xf32>
      %c0_11 = arith.constant 0 : index
      %c0_12 = arith.constant 0 : index
      %16 = vector.load %arg6[%c0_11, %c0_12] : memref<104x128xf32, #tpu.memory_space<vmem>>, vector<104x128xf32>
      tpu.vector_store %arg6[%c0_11, %c0_12], %15 {strides = array<i32>} : memref<104x128xf32, #tpu.memory_space<vmem>>, vector<104x128xf32>,
    } else {
    }
    %c0 = arith.constant 0 : index
    %c0_1 = arith.constant 0 : index
    %3 = vector.load %arg2[%c0, %c0_1] : memref<104x4xf32, #tpu.memory_space<vmem>>, vector<104x4xf32>
    %c0_2 = arith.constant 0 : index
    %c0_3 = arith.constant 0 : index
    %4 = vector.load %arg4[%c0_2, %c0_3] : memref<4x256xf32, #tpu.memory_space<vmem>>, vector<4x256xf32>
    %cst = arith.constant dense<0.000000e+00> : vector<104x256xf32>
    %5 = tpu.matmul %3, %4, %cst {dimension_numbers = #tpu.dot_dimension_numbers<[1], [0], [0], [1], [0, 0, 1, 1], [], []>, precision = #tpu.contract_precision<fp32>} : vector<104x4xf32>, vector<4x256xf32>, vector<104x256xf32> -> vector<104x256xf32>
    %c0_4 = arith.constant 0 : index
    %c0_5 = arith.constant 0 : index
    %6 = vector.load %arg6[%c0_4, %c0_5] : memref<104x128xf32, #tpu.memory_space<vmem>>, vector<104x128xf32>
    %7 = vector.extract_strided_slice %5 {offsets = [0, 0], sizes = [104, 128], strides = [1, 1]} : vector<104x256xf32> to vector<104x128xf32>
    %8 = arith.minimumf %6, %7 : vector<104x128xf32>
    %9 = vector.extract_strided_slice %5 {offsets = [0, 128], sizes = [104, 128], strides = [1, 1]} : vector<104x256xf32> to vector<104x128xf32>
    %10 = arith.minimumf %8, %9 : vector<104x128xf32>
    %c0_6 = arith.constant 0 : index
    %c0_7 = arith.constant 0 : index
    %11 = vector.load %arg6[%c0_6, %c0_7] : memref<104x128xf32, #tpu.memory_space<vmem>>, vector<104x128xf32>
    tpu.vector_store %arg6[%c0_6, %c0_7], %10 {strides = array<i32>} : memref<104x128xf32, #tpu.memory_space<vmem>>, vector<104x128xf32>,
    %c0_i32_8 = arith.constant 0 : i32
    %12 = arith.cmpi eq, %arg1, %c0_i32_8 : i32
    %13 = arith.extui %12 : i1 to i32
    %c0_i32_9 = arith.constant 0 : i32
    %14 = arith.cmpi ne, %13, %c0_i32_9 : i32
    scf.if %14 {
      %c0_10 = arith.constant 0 : index
      %c0_11 = arith.constant 0 : index
      %15 = vector.load %arg6[%c0_10, %c0_11] : memref<104x128xf32, #tpu.memory_space<vmem>>, vector<104x128xf32>
      %cst_12 = arith.constant dense<0x7F800000> : vector<104xf32>
      %16 = vector.multi_reduction <minimumf>, %15, %cst_12 [1] : vector<104x128xf32> to vector<104xf32>
      %17 = vector.shape_cast %16 : vector<104xf32> to vector<104x1xf32>
      %c0_13 = arith.constant 0 : index
      %c0_14 = arith.constant 0 : index
      %18 = vector.load %arg3[%c0_13, %c0_14] : memref<104x1xf32, #tpu.memory_space<vmem>>, vector<104x1xf32>
      %19 = arith.addf %17, %18 : vector<104x1xf32>
      %cst_15 = arith.constant 0.000000e+00 : f32
      %20 = vector.broadcast %cst_15 : f32 to vector<104x1xf32>
      %21 = arith.maximumf %19, %20 : vector<104x1xf32>
      %22 = math.sqrt %21 : vector<104x1xf32>
      %c0_16 = arith.constant 0 : index
      %c0_17 = arith.constant 0 : index
      %23 = vector.load %arg5[%c0_16, %c0_17] : memref<104x1xf32, #tpu.memory_space<vmem>>, vector<104x1xf32>
      tpu.vector_store %arg5[%c0_16, %c0_17], %22 {strides = array<i32>} : memref<104x1xf32, #tpu.memory_space<vmem>>, vector<104x1xf32>,
    } else {
    }
    return
  }
  func.func @transform_0(%arg0: i32, %arg1: i32) -> (i32, i32) {
    %c0_i32 = arith.constant 0 : i32
    %c0_i32_0 = arith.constant 0 : i32
    return %arg0, %c0_i32 : i32, i32
  }
  func.func @transform_1(%arg0: i32, %arg1: i32) -> (i32, i32) {
    %c0_i32 = arith.constant 0 : i32
    %c0_i32_0 = arith.constant 0 : i32
    return %arg0, %c0_i32 : i32, i32
  }
  func.func @transform_2(%arg0: i32, %arg1: i32) -> (i32, i32) {
    %c0_i32 = arith.constant 0 : i32
    %c0_i32_0 = arith.constant 0 : i32
    return %c0_i32, %arg1 : i32, i32
  }
  func.func @transform_3(%arg0: i32, %arg1: i32) -> (i32, i32) {
    %c0_i32 = arith.constant 0 : i32
    %c0_i32_0 = arith.constant 0 : i32
    return %arg0, %c0_i32 : i32, i32
  }
}

</mosaic_0001>

<llo_original>
// kernel: tpu_custom_call.1
$region0: #{tpu_custom_call.1}
  #allocation0 [shape = 'u32[]', space=smem, size = 0x4, offset = 0x4, fixed_abs, tag = 'smem constant byte address 0x4 - core index']
  #allocation1 [shape = 'u32[144,128]{1,0:T(1,128)}', space=vmem, size = 0x12000, scoped, tag = 'internal scratch']
  #allocation2 [shape = 'f32[104,128]{1,0:T(8,128)}', space=vmem, size = 0xd000, scoped, tag = 'scratch operand']
  %s0 = inlined_call_operand.vmem [shape: f32[104,4], index: 0, kind: input, shape index: {}]
  %s1 = inlined_call_operand.vmem [shape: f32[104,1], index: 1, kind: input, shape index: {}]
  %s2 = inlined_call_operand.vmem [shape: f32[4,256], index: 2, kind: input, shape index: {}]
  %s3 = inlined_call_operand.vmem [shape: f32[104,1], index: 3, kind: output, shape index: {}]
  %s4 = sld [smem:[#allocation0]]
  $region30: #{tpu_custom_call.1} parent=0
    _
  %s6 = ssub.s32 1, %s4
  %s7 = scalar_select 0, %s6, %s4
  // Predicated region
  $region2: #{tpu_custom_call.1} parent=0 // pred_check
    _
  $region3: #{tpu_custom_call.1} parent=0 // pred_check_branch
    %9 = sbr.rel (0) target = $region5
  $region4: #{tpu_custom_call.1} parent=0 // pred_region
    _
  $region5: #{tpu_custom_call.1} parent=0 // pred_fallthru
    _
  // Predicated region
  $region6: #{tpu_custom_call.1} parent=0 // pred_check
    _
  $region7: #{tpu_custom_call.1} parent=0 // pred_check_branch
    %11 = sbr.rel (0) target = $region9
  $region8: #{tpu_custom_call.1} parent=0 // pred_region
    _
  $region9: #{tpu_custom_call.1} parent=0 // pred_fallthru
    _
  // Predicated region
  $region10: #{tpu_custom_call.1} parent=0 // pred_check
    _
  $region11: #{tpu_custom_call.1} parent=0 // pred_check_branch
    %13 = sbr.rel (0) target = $region13
  $region12: #{tpu_custom_call.1} parent=0 // pred_region
    _
  $region13: #{tpu_custom_call.1} parent=0 // pred_fallthru
    _
  %p14 = scmp.eq.s32.totalorder 0, 0
  // Predicated region
  $region14: #{tpu_custom_call.1} parent=0 // pred_check
    %p15 = pneg %p14
  $region15: #{tpu_custom_call.1} parent=0 // pred_check_branch
    %17 = sbr.rel (%p15) target = $region17
  $region16: #{tpu_custom_call.1} parent=0 // pred_region
    %18 = vst [vmem:[#allocation2] sm:$0xff] inf
    %19 = vst [vmem:[#allocation2 + $0x8] sm:$0xff] inf
    %20 = vst [vmem:[#allocation2 + $0x10] sm:$0xff] inf
    %21 = vst [vmem:[#allocation2 + $0x18] sm:$0xff] inf
    %22 = vst [vmem:[#allocation2 + $0x20] sm:$0xff] inf
    %23 = vst [vmem:[#allocation2 + $0x28] sm:$0xff] inf
    %24 = vst [vmem:[#allocation2 + $0x30] sm:$0xff] inf
    %25 = vst [vmem:[#allocation2 + $0x38] sm:$0xff] inf
    %26 = vst [vmem:[#allocation2 + $0x40] sm:$0xff] inf
    %27 = vst [vmem:[#allocation2 + $0x48] sm:$0xff] inf
    %28 = vst [vmem:[#allocation2 + $0x50] sm:$0xff] inf
    %29 = vst [vmem:[#allocation2 + $0x58] sm:$0xff] inf
    %30 = vst [vmem:[#allocation2 + $0x60] sm:$0xff] inf
  $region17: #{tpu_custom_call.1} parent=0 // pred_fallthru
    _
  %v31 = vld [vmem:[%s0] sm:$0xff]
  %v32 = vld [vmem:[%s0 + $0x8] sm:$0xff]
  %v33 = vld [vmem:[%s0 + $0x10] sm:$0xff]
  %v34 = vld [vmem:[%s0 + $0x18] sm:$0xff]
  %v35 = vld [vmem:[%s0 + $0x20] sm:$0xff]
  %v36 = vld [vmem:[%s0 + $0x28] sm:$0xff]
  %v37 = vld [vmem:[%s0 + $0x30] sm:$0xff]
  %v38 = vld [vmem:[%s0 + $0x38] sm:$0xff]
  %v39 = vld [vmem:[%s0 + $0x40] sm:$0xff]
  %v40 = vld [vmem:[%s0 + $0x48] sm:$0xff]
  %v41 = vld [vmem:[%s0 + $0x50] sm:$0xff]
  %v42 = vld [vmem:[%s0 + $0x58] sm:$0xff]
  %v43 = vld [vmem:[%s0 + $0x60] sm:$0xff]
  %v44 = vld [vmem:[%s2] sm:$0xff]
  %v46 = vcombine.high %v44, %v44
  %vm47 = vcmask 31744
  %v49 = vsel %vm47, %v31, 0
  %v52 = vsel %vm47, %v32, 0
  %v55 = vsel %vm47, %v33, 0
  %v58 = vsel %vm47, %v34, 0
  %v61 = vsel %vm47, %v35, 0
  %v64 = vsel %vm47, %v36, 0
  %v67 = vsel %vm47, %v37, 0
  %v70 = vsel %vm47, %v38, 0
  %v73 = vsel %vm47, %v39, 0
  %v76 = vsel %vm47, %v40, 0
  %v79 = vsel %vm47, %v41, 0
  %v82 = vsel %vm47, %v42, 0
  %v85 = vsel %vm47, %v43, 0
  %vm87 = vcmask 1043456
  %v88 = vsel %vm87, %v44, 0
  %v90 = vsel %vm87, %v46, 0
  %92 = vmatprep.subr.mxu0 0.0
  %93 = vmatpush1.msra.mxu0 0.0
  %94 = vmatprep.subr.mxu0 0.0
  %95 = vmatpush1.msra.mxu0 0.0
  %96 = vmatprep.subr.mxu0 0.0
  %97 = vmatpush1.msra.mxu0 0.0
  %98 = vmatprep.subr.mxu0 0.0
  %99 = vmatpush1.msra.mxu0 0.0
  %100 = vmatprep.subr.mxu0 0.0
  %101 = vmatpush1.msra.mxu0 0.0
  %102 = vmatprep.subr.mxu0 0.0
  %103 = vmatpush1.msra.mxu0 0.0
  %104 = vmatprep.subr.mxu0 0.0
  %105 = vmatpush1.msra.mxu0 0.0
  %106 = vmatprep.subr.mxu0 0.0
  %107 = vmatpush1.msra.mxu0 0.0
  %108 = vmatprep.subr.mxu0 0.0
  %109 = vmatpush1.msra.mxu0 0.0
  %110 = vmatprep.subr.mxu0 0.0
  %111 = vmatpush1.msra.mxu0 0.0
  %112 = vmatprep.subr.mxu0 0.0
  %113 = vmatpush1.msra.mxu0 0.0
  %114 = vmatprep.subr.mxu0 0.0
  %115 = vmatpush1.msra.mxu0 0.0
  %116 = vmatprep.subr.mxu0 0.0
  %117 = vmatpush1.msra.mxu0 0.0
  %118 = vmatprep.subr.mxu0 0.0
  %119 = vmatpush1.msra.mxu0 0.0
  %120 = vmatprep.subr.mxu0 0.0
  %121 = vmatpush1.msra.mxu0 0.0
  %v122 = vand.u32 %v90, 4294901760
  %123 = vmatprep.subr.mxu0 %v122
  %v124 = vand.u32 %v88, 4294901760
  %125 = vmatpush1.msra.mxu0 %v124
  %126 = vmatprep.subr.mxu0 0.0
  %127 = vmatpush2.msra.mxu0 0.0
  %128 = vmatprep.subr.mxu0 0.0
  %129 = vmatpush2.msra.mxu0 0.0
  %130 = vmatprep.subr.mxu0 0.0
  %131 = vmatpush2.msra.mxu0 0.0
  %132 = vmatprep.subr.mxu0 0.0
  %133 = vmatpush2.msra.mxu0 0.0
  %134 = vmatprep.subr.mxu0 0.0
  %135 = vmatpush2.msra.mxu0 0.0
  %136 = vmatprep.subr.mxu0 0.0
  %137 = vmatpush2.msra.mxu0 0.0
  %138 = vmatprep.subr.mxu0 0.0
  %139 = vmatpush2.msra.mxu0 0.0
  %140 = vmatprep.subr.mxu0 0.0
  %141 = vmatpush2.msra.mxu0 0.0
  %142 = vmatprep.subr.mxu0 0.0
  %143 = vmatpush2.msra.mxu0 0.0
  %144 = vmatprep.subr.mxu0 0.0
  %145 = vmatpush2.msra.mxu0 0.0
  %146 = vmatprep.subr.mxu0 0.0
  %147 = vmatpush2.msra.mxu0 0.0
  %148 = vmatprep.subr.mxu0 0.0
  %149 = vmatpush2.msra.mxu0 0.0
  %150 = vmatprep.subr.mxu0 0.0
  %151 = vmatpush2.msra.mxu0 0.0
  %152 = vmatprep.subr.mxu0 0.0
  %153 = vmatpush2.msra.mxu0 0.0
  %154 = vmatprep.subr.mxu0 0.0
  %155 = vmatpush2.msra.mxu0 0.0
  %156 = vmatprep.subr.mxu0 0.0
  %157 = vmatpush2.msra.mxu0 0.0
  %158 = vmatprep.mubr.f32.mxu0 0.0
  %v159 = vand.u32 %v49, 4294901760
  %v160 = vsub.f32 %v49, %v159
  %v161 = vand.u32 %v160, 4294901760
  %v162 = vsub.f32 %v160, %v161
  %v163 = vand.u32 %v162, 4294901760
  %164 = vmatmul.mubr.f32.gmra.mxu0 %v163
  %v165 = vpop.f32.mrf.mxu0
  %v166 = vadd.f32 0.0, %v165
  %v167 = vpop.f32.mrf.mxu0
  %v168 = vadd.f32 0.0, %v167
  %169 = vmatprep.mubr.f32.mxu0 0.0
  %v170 = vand.u32 %v52, 4294901760
  %v171 = vsub.f32 %v52, %v170
  %v172 = vand.u32 %v171, 4294901760
  %v173 = vsub.f32 %v171, %v172
  %v174 = vand.u32 %v173, 4294901760
  %175 = vmatmul.mubr.f32.gmra.mxu0 %v174
  %v176 = vpop.f32.mrf.mxu0
  %v177 = vadd.f32 0.0, %v176
  %v178 = vpop.f32.mrf.mxu0
  %v179 = vadd.f32 0.0, %v178
  %180 = vmatprep.mubr.f32.mxu0 0.0
  %v181 = vand.u32 %v55, 4294901760
  %v182 = vsub.f32 %v55, %v181
  %v183 = vand.u32 %v182, 4294901760
  %v184 = vsub.f32 %v182, %v183
  %v185 = vand.u32 %v184, 4294901760
  %186 = vmatmul.mubr.f32.gmra.mxu0 %v185
  %v187 = vpop.f32.mrf.mxu0
  %v188 = vadd.f32 0.0, %v187
  %v189 = vpop.f32.mrf.mxu0
  %v190 = vadd.f32 0.0, %v189
  %191 = vmatprep.mubr.f32.mxu0 0.0
  %v192 = vand.u32 %v58, 4294901760
  %v193 = vsub.f32 %v58, %v192
  %v194 = vand.u32 %v193, 4294901760
  %v195 = vsub.f32 %v193, %v194
  %v196 = vand.u32 %v195, 4294901760
  %197 = vmatmul.mubr.f32.gmra.mxu0 %v196
  %v198 = vpop.f32.mrf.mxu0
  %v199 = vadd.f32 0.0, %v198
  %v200 = vpop.f32.mrf.mxu0
  %v201 = vadd.f32 0.0, %v200
  %202 = vmatprep.mubr.f32.mxu0 0.0
  %v203 = vand.u32 %v61, 4294901760
  %v204 = vsub.f32 %v61, %v203
  %v205 = vand.u32 %v204, 4294901760
  %v206 = vsub.f32 %v204, %v205
  %v207 = vand.u32 %v206, 4294901760
  %208 = vmatmul.mubr.f32.gmra.mxu0 %v207
  %v209 = vpop.f32.mrf.mxu0
  %v210 = vadd.f32 0.0, %v209
  %v211 = vpop.f32.mrf.mxu0
  %v212 = vadd.f32 0.0, %v211
  %213 = vmatprep.mubr.f32.mxu0 0.0
  %v214 = vand.u32 %v64, 4294901760
  %v215 = vsub.f32 %v64, %v214
  %v216 = vand.u32 %v215, 4294901760
  %v217 = vsub.f32 %v215, %v216
  %v218 = vand.u32 %v217, 4294901760
  %219 = vmatmul.mubr.f32.gmra.mxu0 %v218
  %v220 = vpop.f32.mrf.mxu0
  %v221 = vadd.f32 0.0, %v220
  %v222 = vpop.f32.mrf.mxu0
  %v223 = vadd.f32 0.0, %v222
  %224 = vmatprep.mubr.f32.mxu0 0.0
  %v225 = vand.u32 %v67, 4294901760
  %v226 = vsub.f32 %v67, %v225
  %v227 = vand.u32 %v226, 4294901760
  %v228 = vsub.f32 %v226, %v227
  %v229 = vand.u32 %v228, 4294901760
  %230 = vmatmul.mubr.f32.gmra.mxu0 %v229
  %v231 = vpop.f32.mrf.mxu0
  %v232 = vadd.f32 0.0, %v231
  %v233 = vpop.f32.mrf.mxu0
  %v234 = vadd.f32 0.0, %v233
  %235 = vmatprep.mubr.f32.mxu0 0.0
  %v236 = vand.u32 %v70, 4294901760
  %v237 = vsub.f32 %v70, %v236
  %v238 = vand.u32 %v237, 4294901760
  %v239 = vsub.f32 %v237, %v238
  %v240 = vand.u32 %v239, 4294901760
  %241 = vmatmul.mubr.f32.gmra.mxu0 %v240
  %v242 = vpop.f32.mrf.mxu0
  %v243 = vadd.f32 0.0, %v242
  %v244 = vpop.f32.mrf.mxu0
  %v245 = vadd.f32 0.0, %v244
  %246 = vmatprep.mubr.f32.mxu0 0.0
  %v247 = vand.u32 %v73, 4294901760
  %v248 = vsub.f32 %v73, %v247
  %v249 = vand.u32 %v248, 4294901760
  %v250 = vsub.f32 %v248, %v249
  %v251 = vand.u32 %v250, 4294901760
  %252 = vmatmul.mubr.f32.gmra.mxu0 %v251
  %v253 = vpop.f32.mrf.mxu0
  %v254 = vadd.f32 0.0, %v253
  %v255 = vpop.f32.mrf.mxu0
  %v256 = vadd.f32 0.0, %v255
  %257 = vmatprep.mubr.f32.mxu0 0.0
  %v258 = vand.u32 %v76, 4294901760
  %v259 = vsub.f32 %v76, %v258
  %v260 = vand.u32 %v259, 4294901760
  %v261 = vsub.f32 %v259, %v260
  %v262 = vand.u32 %v261, 4294901760
  %263 = vmatmul.mubr.f32.gmra.mxu0 %v262
  %v264 = vpop.f32.mrf.mxu0
  %v265 = vadd.f32 0.0, %v264
  %v266 = vpop.f32.mrf.mxu0
  %v267 = vadd.f32 0.0, %v266
  %268 = vmatprep.mubr.f32.mxu0 0.0
  %v269 = vand.u32 %v79, 4294901760
  %v270 = vsub.f32 %v79, %v269
  %v271 = vand.u32 %v270, 4294901760
  %v272 = vsub.f32 %v270, %v271
  %v273 = vand.u32 %v272, 4294901760
  %274 = vmatmul.mubr.f32.gmra.mxu0 %v273
  %v275 = vpop.f32.mrf.mxu0
  %v276 = vadd.f32 0.0, %v275
  %v277 = vpop.f32.mrf.mxu0
  %v278 = vadd.f32 0.0, %v277
  %279 = vmatprep.mubr.f32.mxu0 0.0
  %v280 = vand.u32 %v82, 4294901760
  %v281 = vsub.f32 %v82, %v280
  %v282 = vand.u32 %v281, 4294901760
  %v283 = vsub.f32 %v281, %v282
  %v284 = vand.u32 %v283, 4294901760
  %285 = vmatmul.mubr.f32.gmra.mxu0 %v284
  %v286 = vpop.f32.mrf.mxu0
  %v287 = vadd.f32 0.0, %v286
  %v288 = vpop.f32.mrf.mxu0
  %v289 = vadd.f32 0.0, %v288
  %290 = vmatprep.mubr.f32.mxu0 0.0
  %v291 = vand.u32 %v85, 4294901760
  %v292 = vsub.f32 %v85, %v291
  %v293 = vand.u32 %v292, 4294901760
  %v294 = vsub.f32 %v292, %v293
  %v295 = vand.u32 %v294, 4294901760
  %296 = vmatmul.mubr.f32.gmra.mxu0 %v295
  %v297 = vpop.f32.mrf.mxu0
  %v298 = vadd.f32 0.0, %v297
  %v299 = vpop.f32.mrf.mxu0
  %v300 = vadd.f32 0.0, %v299
  %301 = vdwg.mxu0
  %302 = vmatprep.subr.mxu0 0.0
  %303 = vmatpush1.msra.mxu0 0.0
  %304 = vmatprep.subr.mxu0 0.0
  %305 = vmatpush1.msra.mxu0 0.0
  %306 = vmatprep.subr.mxu0 0.0
  %307 = vmatpush1.msra.mxu0 0.0
  %308 = vmatprep.subr.mxu0 0.0
  %309 = vmatpush1.msra.mxu0 0.0
  %310 = vmatprep.subr.mxu0 0.0
  %311 = vmatpush1.msra.mxu0 0.0
  %312 = vmatprep.subr.mxu0 0.0
  %313 = vmatpush1.msra.mxu0 0.0
  %314 = vmatprep.subr.mxu0 0.0
  %315 = vmatpush1.msra.mxu0 0.0
  %316 = vmatprep.subr.mxu0 0.0
  %317 = vmatpush1.msra.mxu0 0.0
  %318 = vmatprep.subr.mxu0 0.0
  %319 = vmatpush1.msra.mxu0 0.0
  %320 = vmatprep.subr.mxu0 0.0
  %321 = vmatpush1.msra.mxu0 0.0
  %322 = vmatprep.subr.mxu0 0.0
  %323 = vmatpush1.msra.mxu0 0.0
  %324 = vmatprep.subr.mxu0 0.0
  %325 = vmatpush1.msra.mxu0 0.0
  %326 = vmatprep.subr.mxu0 0.0
  %327 = vmatpush1.msra.mxu0 0.0
  %328 = vmatprep.subr.mxu0 0.0
  %329 = vmatpush1.msra.mxu0 0.0
  %330 = vmatprep.subr.mxu0 0.0
  %331 = vmatpush1.msra.mxu0 0.0
  %v332 = vand.u32 %v90, 4294901760
  %v333 = vsub.f32 %v90, %v332
  %v334 = vand.u32 %v333, 4294901760
  %v335 = vsub.f32 %v333, %v334
  %v336 = vand.u32 %v335, 4294901760
  %337 = vmatprep.subr.mxu0 %v336
  %v338 = vand.u32 %v88, 4294901760
  %v339 = vsub.f32 %v88, %v338
  %v340 = vand.u32 %v339, 4294901760
  %v341 = vsub.f32 %v339, %v340
  %v342 = vand.u32 %v341, 4294901760
  %343 = vmatpush1.msra.mxu0 %v342
  %344 = vmatprep.subr.mxu0 0.0
  %345 = vmatpush2.msra.mxu0 0.0
  %346 = vmatprep.subr.mxu0 0.0
  %347 = vmatpush2.msra.mxu0 0.0
  %348 = vmatprep.subr.mxu0 0.0
  %349 = vmatpush2.msra.mxu0 0.0
  %350 = vmatprep.subr.mxu0 0.0
  %351 = vmatpush2.msra.mxu0 0.0
  %352 = vmatprep.subr.mxu0 0.0
  %353 = vmatpush2.msra.mxu0 0.0
  %354 = vmatprep.subr.mxu0 0.0
  %355 = vmatpush2.msra.mxu0 0.0
  %356 = vmatprep.subr.mxu0 0.0
  %357 = vmatpush2.msra.mxu0 0.0
  %358 = vmatprep.subr.mxu0 0.0
  %359 = vmatpush2.msra.mxu0 0.0
  %360 = vmatprep.subr.mxu0 0.0
  %361 = vmatpush2.msra.mxu0 0.0
  %362 = vmatprep.subr.mxu0 0.0
  %363 = vmatpush2.msra.mxu0 0.0
  %364 = vmatprep.subr.mxu0 0.0
  %365 = vmatpush2.msra.mxu0 0.0
  %366 = vmatprep.subr.mxu0 0.0
  %367 = vmatpush2.msra.mxu0 0.0
  %368 = vmatprep.subr.mxu0 0.0
  %369 = vmatpush2.msra.mxu0 0.0
  %370 = vmatprep.subr.mxu0 0.0
  %371 = vmatpush2.msra.mxu0 0.0
  %372 = vmatprep.subr.mxu0 0.0
  %373 = vmatpush2.msra.mxu0 0.0
  %374 = vmatprep.subr.mxu0 0.0
  %375 = vmatpush2.msra.mxu0 0.0
  %376 = vmatprep.mubr.f32.mxu0 0.0
  %v377 = vand.u32 %v49, 4294901760
  %378 = vmatmul.mubr.f32.gmra.mxu0 %v377
  %v379 = vpop.f32.mrf.mxu0
  %v380 = vadd.f32 %v166, %v379
  %v381 = vpop.f32.mrf.mxu0
  %v382 = vadd.f32 %v168, %v381
  %383 = vmatprep.mubr.f32.mxu0 0.0
  %v384 = vand.u32 %v52, 4294901760
  %385 = vmatmul.mubr.f32.gmra.mxu0 %v384
  %v386 = vpop.f32.mrf.mxu0
  %v387 = vadd.f32 %v177, %v386
  %v388 = vpop.f32.mrf.mxu0
  %v389 = vadd.f32 %v179, %v388
  %390 = vmatprep.mubr.f32.mxu0 0.0
  %v391 = vand.u32 %v55, 4294901760
  %392 = vmatmul.mubr.f32.gmra.mxu0 %v391
  %v393 = vpop.f32.mrf.mxu0
  %v394 = vadd.f32 %v188, %v393
  %v395 = vpop.f32.mrf.mxu0
  %v396 = vadd.f32 %v190, %v395
  %397 = vmatprep.mubr.f32.mxu0 0.0
  %v398 = vand.u32 %v58, 4294901760
  %399 = vmatmul.mubr.f32.gmra.mxu0 %v398
  %v400 = vpop.f32.mrf.mxu0
  %v401 = vadd.f32 %v199, %v400
  %v402 = vpop.f32.mrf.mxu0
  %v403 = vadd.f32 %v201, %v402
  %404 = vmatprep.mubr.f32.mxu0 0.0
  %v405 = vand.u32 %v61, 4294901760
  %406 = vmatmul.mubr.f32.gmra.mxu0 %v405
  %v407 = vpop.f32.mrf.mxu0
  %v408 = vadd.f32 %v210, %v407
  %v409 = vpop.f32.mrf.mxu0
  %v410 = vadd.f32 %v212, %v409
  %411 = vmatprep.mubr.f32.mxu0 0.0
  %v412 = vand.u32 %v64, 4294901760
  %413 = vmatmul.mubr.f32.gmra.mxu0 %v412
  %v414 = vpop.f32.mrf.mxu0
  %v415 = vadd.f32 %v221, %v414
  %v416 = vpop.f32.mrf.mxu0
  %v417 = vadd.f32 %v223, %v416
  %418 = vmatprep.mubr.f32.mxu0 0.0
  %v419 = vand.u32 %v67, 4294901760
  %420 = vmatmul.mubr.f32.gmra.mxu0 %v419
  %v421 = vpop.f32.mrf.mxu0
  %v422 = vadd.f32 %v232, %v421
  %v423 = vpop.f32.mrf.mxu0
  %v424 = vadd.f32 %v234, %v423
  %425 = vmatprep.mubr.f32.mxu0 0.0
  %v426 = vand.u32 %v70, 4294901760
  %427 = vmatmul.mubr.f32.gmra.mxu0 %v426
  %v428 = vpop.f32.mrf.mxu0
  %v429 = vadd.f32 %v243, %v428
  %v430 = vpop.f32.mrf.mxu0
  %v431 = vadd.f32 %v245, %v430
  %432 = vmatprep.mubr.f32.mxu0 0.0
  %v433 = vand.u32 %v73, 4294901760
  %434 = vmatmul.mubr.f32.gmra.mxu0 %v433
  %v435 = vpop.f32.mrf.mxu0
  %v436 = vadd.f32 %v254, %v435
  %v437 = vpop.f32.mrf.mxu0
  %v438 = vadd.f32 %v256, %v437
  %439 = vmatprep.mubr.f32.mxu0 0.0
  %v440 = vand.u32 %v76, 4294901760
  %441 = vmatmul.mubr.f32.gmra.mxu0 %v440
  %v442 = vpop.f32.mrf.mxu0
  %v443 = vadd.f32 %v265, %v442
  %v444 = vpop.f32.mrf.mxu0
  %v445 = vadd.f32 %v267, %v444
  %446 = vmatprep.mubr.f32.mxu0 0.0
  %v447 = vand.u32 %v79, 4294901760
  %448 = vmatmul.mubr.f32.gmra.mxu0 %v447
  %v449 = vpop.f32.mrf.mxu0
  %v450 = vadd.f32 %v276, %v449
  %v451 = vpop.f32.mrf.mxu0
  %v452 = vadd.f32 %v278, %v451
  %453 = vmatprep.mubr.f32.mxu0 0.0
  %v454 = vand.u32 %v82, 4294901760
  %455 = vmatmul.mubr.f32.gmra.mxu0 %v454
  %v456 = vpop.f32.mrf.mxu0
  %v457 = vadd.f32 %v287, %v456
  %v458 = vpop.f32.mrf.mxu0
  %v459 = vadd.f32 %v289, %v458
  %460 = vmatprep.mubr.f32.mxu0 0.0
  %v461 = vand.u32 %v85, 4294901760
  %462 = vmatmul.mubr.f32.gmra.mxu0 %v461
  %v463 = vpop.f32.mrf.mxu0
  %v464 = vadd.f32 %v298, %v463
  %v465 = vpop.f32.mrf.mxu0
  %v466 = vadd.f32 %v300, %v465
  %467 = vdwg.mxu0
  %468 = vmatprep.subr.mxu0 0.0
  %469 = vmatpush1.msra.mxu0 0.0
  %470 = vmatprep.subr.mxu0 0.0
  %471 = vmatpush1.msra.mxu0 0.0
  %472 = vmatprep.subr.mxu0 0.0
  %473 = vmatpush1.msra.mxu0 0.0
  %474 = vmatprep.subr.mxu0 0.0
  %475 = vmatpush1.msra.mxu0 0.0
  %476 = vmatprep.subr.mxu0 0.0
  %477 = vmatpush1.msra.mxu0 0.0
  %478 = vmatprep.subr.mxu0 0.0
  %479 = vmatpush1.msra.mxu0 0.0
  %480 = vmatprep.subr.mxu0 0.0
  %481 = vmatpush1.msra.mxu0 0.0
  %482 = vmatprep.subr.mxu0 0.0
  %483 = vmatpush1.msra.mxu0 0.0
  %484 = vmatprep.subr.mxu0 0.0
  %485 = vmatpush1.msra.mxu0 0.0
  %486 = vmatprep.subr.mxu0 0.0
  %487 = vmatpush1.msra.mxu0 0.0
  %488 = vmatprep.subr.mxu0 0.0
  %489 = vmatpush1.msra.mxu0 0.0
  %490 = vmatprep.subr.mxu0 0.0
  %491 = vmatpush1.msra.mxu0 0.0
  %492 = vmatprep.subr.mxu0 0.0
  %493 = vmatpush1.msra.mxu0 0.0
  %494 = vmatprep.subr.mxu0 0.0
  %495 = vmatpush1.msra.mxu0 0.0
  %496 = vmatprep.subr.mxu0 0.0
  %497 = vmatpush1.msra.mxu0 0.0
  %v498 = vand.u32 %v90, 4294901760
  %v499 = vsub.f32 %v90, %v498
  %500 = vmatprep.subr.mxu0 %v499
  %v501 = vand.u32 %v88, 4294901760
  %v502 = vsub.f32 %v88, %v501
  %503 = vmatpush1.msra.mxu0 %v502
  %504 = vmatprep.subr.mxu0 0.0
  %505 = vmatpush2.msra.mxu0 0.0
  %506 = vmatprep.subr.mxu0 0.0
  %507 = vmatpush2.msra.mxu0 0.0
  %508 = vmatprep.subr.mxu0 0.0
  %509 = vmatpush2.msra.mxu0 0.0
  %510 = vmatprep.subr.mxu0 0.0
  %511 = vmatpush2.msra.mxu0 0.0
  %512 = vmatprep.subr.mxu0 0.0
  %513 = vmatpush2.msra.mxu0 0.0
  %514 = vmatprep.subr.mxu0 0.0
  %515 = vmatpush2.msra.mxu0 0.0
  %516 = vmatprep.subr.mxu0 0.0
  %517 = vmatpush2.msra.mxu0 0.0
  %518 = vmatprep.subr.mxu0 0.0
  %519 = vmatpush2.msra.mxu0 0.0
  %520 = vmatprep.subr.mxu0 0.0
  %521 = vmatpush2.msra.mxu0 0.0
  %522 = vmatprep.subr.mxu0 0.0
  %523 = vmatpush2.msra.mxu0 0.0
  %524 = vmatprep.subr.mxu0 0.0
  %525 = vmatpush2.msra.mxu0 0.0
  %526 = vmatprep.subr.mxu0 0.0
  %527 = vmatpush2.msra.mxu0 0.0
  %528 = vmatprep.subr.mxu0 0.0
  %529 = vmatpush2.msra.mxu0 0.0
  %530 = vmatprep.subr.mxu0 0.0
  %531 = vmatpush2.msra.mxu0 0.0
  %532 = vmatprep.subr.mxu0 0.0
  %533 = vmatpush2.msra.mxu0 0.0
  %534 = vmatprep.subr.mxu0 0.0
  %535 = vmatpush2.msra.mxu0 0.0
  %536 = vmatprep.mubr.f32.mxu0 0.0
  %v537 = vand.u32 %v49, 4294901760
  %v538 = vsub.f32 %v49, %v537
  %539 = vmatmul.mubr.f32.gmra.mxu0 %v538
  %v540 = vpop.f32.mrf.mxu0
  %v541 = vadd.f32 %v380, %v540
  %v542 = vpop.f32.mrf.mxu0
  %v543 = vadd.f32 %v382, %v542
  %544 = vmatprep.mubr.f32.mxu0 0.0
  %v545 = vand.u32 %v52, 4294901760
  %v546 = vsub.f32 %v52, %v545
  %547 = vmatmul.mubr.f32.gmra.mxu0 %v546
  %v548 = vpop.f32.mrf.mxu0
  %v549 = vadd.f32 %v387, %v548
  %v550 = vpop.f32.mrf.mxu0
  %v551 = vadd.f32 %v389, %v550
  %552 = vmatprep.mubr.f32.mxu0 0.0
  %v553 = vand.u32 %v55, 4294901760
  %v554 = vsub.f32 %v55, %v553
  %555 = vmatmul.mubr.f32.gmra.mxu0 %v554
  %v556 = vpop.f32.mrf.mxu0
  %v557 = vadd.f32 %v394, %v556
  %v558 = vpop.f32.mrf.mxu0
  %v559 = vadd.f32 %v396, %v558
  %560 = vmatprep.mubr.f32.mxu0 0.0
  %v561 = vand.u32 %v58, 4294901760
  %v562 = vsub.f32 %v58, %v561
  %563 = vmatmul.mubr.f32.gmra.mxu0 %v562
  %v564 = vpop.f32.mrf.mxu0
  %v565 = vadd.f32 %v401, %v564
  %v566 = vpop.f32.mrf.mxu0
  %v567 = vadd.f32 %v403, %v566
  %568 = vmatprep.mubr.f32.mxu0 0.0
  %v569 = vand.u32 %v61, 4294901760
  %v570 = vsub.f32 %v61, %v569
  %571 = vmatmul.mubr.f32.gmra.mxu0 %v570
  %v572 = vpop.f32.mrf.mxu0
  %v573 = vadd.f32 %v408, %v572
  %v574 = vpop.f32.mrf.mxu0
  %v575 = vadd.f32 %v410, %v574
  %576 = vmatprep.mubr.f32.mxu0 0.0
  %v577 = vand.u32 %v64, 4294901760
  %v578 = vsub.f32 %v64, %v577
  %579 = vmatmul.mubr.f32.gmra.mxu0 %v578
  %v580 = vpop.f32.mrf.mxu0
  %v581 = vadd.f32 %v415, %v580
  %v582 = vpop.f32.mrf.mxu0
  %v583 = vadd.f32 %v417, %v582
  %584 = vmatprep.mubr.f32.mxu0 0.0
  %v585 = vand.u32 %v67, 4294901760
  %v586 = vsub.f32 %v67, %v585
  %587 = vmatmul.mubr.f32.gmra.mxu0 %v586
  %v588 = vpop.f32.mrf.mxu0
  %v589 = vadd.f32 %v422, %v588
  %v590 = vpop.f32.mrf.mxu0
  %v591 = vadd.f32 %v424, %v590
  %592 = vmatprep.mubr.f32.mxu0 0.0
  %v593 = vand.u32 %v70, 4294901760
  %v594 = vsub.f32 %v70, %v593
  %595 = vmatmul.mubr.f32.gmra.mxu0 %v594
  %v596 = vpop.f32.mrf.mxu0
  %v597 = vadd.f32 %v429, %v596
  %v598 = vpop.f32.mrf.mxu0
  %v599 = vadd.f32 %v431, %v598
  %600 = vmatprep.mubr.f32.mxu0 0.0
  %v601 = vand.u32 %v73, 4294901760
  %v602 = vsub.f32 %v73, %v601
  %603 = vmatmul.mubr.f32.gmra.mxu0 %v602
  %v604 = vpop.f32.mrf.mxu0
  %v605 = vadd.f32 %v436, %v604
  %v606 = vpop.f32.mrf.mxu0
  %v607 = vadd.f32 %v438, %v606
  %608 = vmatprep.mubr.f32.mxu0 0.0
  %v609 = vand.u32 %v76, 4294901760
  %v610 = vsub.f32 %v76, %v609
  %611 = vmatmul.mubr.f32.gmra.mxu0 %v610
  %v612 = vpop.f32.mrf.mxu0
  %v613 = vadd.f32 %v443, %v612
  %v614 = vpop.f32.mrf.mxu0
  %v615 = vadd.f32 %v445, %v614
  %616 = vmatprep.mubr.f32.mxu0 0.0
  %v617 = vand.u32 %v79, 4294901760
  %v618 = vsub.f32 %v79, %v617
  %619 = vmatmul.mubr.f32.gmra.mxu0 %v618
  %v620 = vpop.f32.mrf.mxu0
  %v621 = vadd.f32 %v450, %v620
  %v622 = vpop.f32.mrf.mxu0
  %v623 = vadd.f32 %v452, %v622
  %624 = vmatprep.mubr.f32.mxu0 0.0
  %v625 = vand.u32 %v82, 4294901760
  %v626 = vsub.f32 %v82, %v625
  %627 = vmatmul.mubr.f32.gmra.mxu0 %v626
  %v628 = vpop.f32.mrf.mxu0
  %v629 = vadd.f32 %v457, %v628
  %v630 = vpop.f32.mrf.mxu0
  %v631 = vadd.f32 %v459, %v630
  %632 = vmatprep.mubr.f32.mxu0 0.0
  %v633 = vand.u32 %v85, 4294901760
  %v634 = vsub.f32 %v85, %v633
  %635 = vmatmul.mubr.f32.gmra.mxu0 %v634
  %v636 = vpop.f32.mrf.mxu0
  %v637 = vadd.f32 %v464, %v636
  %v638 = vpop.f32.mrf.mxu0
  %v639 = vadd.f32 %v466, %v638
  %640 = vdwg.mxu0
  %641 = vmatprep.subr.mxu0 0.0
  %642 = vmatpush1.msra.mxu0 0.0
  %643 = vmatprep.subr.mxu0 0.0
  %644 = vmatpush1.msra.mxu0 0.0
  %645 = vmatprep.subr.mxu0 0.0
  %646 = vmatpush1.msra.mxu0 0.0
  %647 = vmatprep.subr.mxu0 0.0
  %648 = vmatpush1.msra.mxu0 0.0
  %649 = vmatprep.subr.mxu0 0.0
  %650 = vmatpush1.msra.mxu0 0.0
  %651 = vmatprep.subr.mxu0 0.0
  %652 = vmatpush1.msra.mxu0 0.0
  %653 = vmatprep.subr.mxu0 0.0
  %654 = vmatpush1.msra.mxu0 0.0
  %655 = vmatprep.subr.mxu0 0.0
  %656 = vmatpush1.msra.mxu0 0.0
  %657 = vmatprep.subr.mxu0 0.0
  %658 = vmatpush1.msra.mxu0 0.0
  %659 = vmatprep.subr.mxu0 0.0
  %660 = vmatpush1.msra.mxu0 0.0
  %661 = vmatprep.subr.mxu0 0.0
  %662 = vmatpush1.msra.mxu0 0.0
  %663 = vmatprep.subr.mxu0 0.0
  %664 = vmatpush1.msra.mxu0 0.0
  %665 = vmatprep.subr.mxu0 0.0
  %666 = vmatpush1.msra.mxu0 0.0
  %667 = vmatprep.subr.mxu0 0.0
  %668 = vmatpush1.msra.mxu0 0.0
  %669 = vmatprep.subr.mxu0 0.0
  %670 = vmatpush1.msra.mxu0 0.0
  %v671 = vand.u32 %v90, 4294901760
  %672 = vmatprep.subr.mxu0 %v671
  %v673 = vand.u32 %v88, 4294901760
  %674 = vmatpush1.msra.mxu0 %v673
  %675 = vmatprep.subr.mxu0 0.0
  %676 = vmatpush2.msra.mxu0 0.0
  %677 = vmatprep.subr.mxu0 0.0
  %678 = vmatpush2.msra.mxu0 0.0
  %679 = vmatprep.subr.mxu0 0.0
  %680 = vmatpush2.msra.mxu0 0.0
  %681 = vmatprep.subr.mxu0 0.0
  %682 = vmatpush2.msra.mxu0 0.0
  %683 = vmatprep.subr.mxu0 0.0
  %684 = vmatpush2.msra.mxu0 0.0
  %685 = vmatprep.subr.mxu0 0.0
  %686 = vmatpush2.msra.mxu0 0.0
  %687 = vmatprep.subr.mxu0 0.0
  %688 = vmatpush2.msra.mxu0 0.0
  %689 = vmatprep.subr.mxu0 0.0
  %690 = vmatpush2.msra.mxu0 0.0
  %691 = vmatprep.subr.mxu0 0.0
  %692 = vmatpush2.msra.mxu0 0.0
  %693 = vmatprep.subr.mxu0 0.0
  %694 = vmatpush2.msra.mxu0 0.0
  %695 = vmatprep.subr.mxu0 0.0
  %696 = vmatpush2.msra.mxu0 0.0
  %697 = vmatprep.subr.mxu0 0.0
  %698 = vmatpush2.msra.mxu0 0.0
  %699 = vmatprep.subr.mxu0 0.0
  %700 = vmatpush2.msra.mxu0 0.0
  %701 = vmatprep.subr.mxu0 0.0
  %702 = vmatpush2.msra.mxu0 0.0
  %703 = vmatprep.subr.mxu0 0.0
  %704 = vmatpush2.msra.mxu0 0.0
  %705 = vmatprep.subr.mxu0 0.0
  %706 = vmatpush2.msra.mxu0 0.0
  %707 = vmatprep.mubr.f32.mxu0 0.0
  %v708 = vand.u32 %v49, 4294901760
  %v709 = vsub.f32 %v49, %v708
  %v710 = vand.u32 %v709, 4294901760
  %711 = vmatmul.mubr.f32.gmra.mxu0 %v710
  %v712 = vpop.f32.mrf.mxu0
  %v713 = vadd.f32 %v541, %v712
  %v714 = vpop.f32.mrf.mxu0
  %v715 = vadd.f32 %v543, %v714
  %716 = vmatprep.mubr.f32.mxu0 0.0
  %v717 = vand.u32 %v52, 4294901760
  %v718 = vsub.f32 %v52, %v717
  %v719 = vand.u32 %v718, 4294901760
  %720 = vmatmul.mubr.f32.gmra.mxu0 %v719
  %v721 = vpop.f32.mrf.mxu0
  %v722 = vadd.f32 %v549, %v721
  %v723 = vpop.f32.mrf.mxu0
  %v724 = vadd.f32 %v551, %v723
  %725 = vmatprep.mubr.f32.mxu0 0.0
  %v726 = vand.u32 %v55, 4294901760
  %v727 = vsub.f32 %v55, %v726
  %v728 = vand.u32 %v727, 4294901760
  %729 = vmatmul.mubr.f32.gmra.mxu0 %v728
  %v730 = vpop.f32.mrf.mxu0
  %v731 = vadd.f32 %v557, %v730
  %v732 = vpop.f32.mrf.mxu0
  %v733 = vadd.f32 %v559, %v732
  %734 = vmatprep.mubr.f32.mxu0 0.0
  %v735 = vand.u32 %v58, 4294901760
  %v736 = vsub.f32 %v58, %v735
  %v737 = vand.u32 %v736, 4294901760
  %738 = vmatmul.mubr.f32.gmra.mxu0 %v737
  %v739 = vpop.f32.mrf.mxu0
  %v740 = vadd.f32 %v565, %v739
  %v741 = vpop.f32.mrf.mxu0
  %v742 = vadd.f32 %v567, %v741
  %743 = vmatprep.mubr.f32.mxu0 0.0
  %v744 = vand.u32 %v61, 4294901760
  %v745 = vsub.f32 %v61, %v744
  %v746 = vand.u32 %v745, 4294901760
  %747 = vmatmul.mubr.f32.gmra.mxu0 %v746
  %v748 = vpop.f32.mrf.mxu0
  %v749 = vadd.f32 %v573, %v748
  %v750 = vpop.f32.mrf.mxu0
  %v751 = vadd.f32 %v575, %v750
  %752 = vmatprep.mubr.f32.mxu0 0.0
  %v753 = vand.u32 %v64, 4294901760
  %v754 = vsub.f32 %v64, %v753
  %v755 = vand.u32 %v754, 4294901760
  %756 = vmatmul.mubr.f32.gmra.mxu0 %v755
  %v757 = vpop.f32.mrf.mxu0
  %v758 = vadd.f32 %v581, %v757
  %v759 = vpop.f32.mrf.mxu0
  %v760 = vadd.f32 %v583, %v759
  %761 = vmatprep.mubr.f32.mxu0 0.0
  %v762 = vand.u32 %v67, 4294901760
  %v763 = vsub.f32 %v67, %v762
  %v764 = vand.u32 %v763, 4294901760
  %765 = vmatmul.mubr.f32.gmra.mxu0 %v764
  %v766 = vpop.f32.mrf.mxu0
  %v767 = vadd.f32 %v589, %v766
  %v768 = vpop.f32.mrf.mxu0
  %v769 = vadd.f32 %v591, %v768
  %770 = vmatprep.mubr.f32.mxu0 0.0
  %v771 = vand.u32 %v70, 4294901760
  %v772 = vsub.f32 %v70, %v771
  %v773 = vand.u32 %v772, 4294901760
  %774 = vmatmul.mubr.f32.gmra.mxu0 %v773
  %v775 = vpop.f32.mrf.mxu0
  %v776 = vadd.f32 %v597, %v775
  %v777 = vpop.f32.mrf.mxu0
  %v778 = vadd.f32 %v599, %v777
  %779 = vmatprep.mubr.f32.mxu0 0.0
  %v780 = vand.u32 %v73, 4294901760
  %v781 = vsub.f32 %v73, %v780
  %v782 = vand.u32 %v781, 4294901760
  %783 = vmatmul.mubr.f32.gmra.mxu0 %v782
  %v784 = vpop.f32.mrf.mxu0
  %v785 = vadd.f32 %v605, %v784
  %v786 = vpop.f32.mrf.mxu0
  %v787 = vadd.f32 %v607, %v786
  %788 = vmatprep.mubr.f32.mxu0 0.0
  %v789 = vand.u32 %v76, 4294901760
  %v790 = vsub.f32 %v76, %v789
  %v791 = vand.u32 %v790, 4294901760
  %792 = vmatmul.mubr.f32.gmra.mxu0 %v791
  %v793 = vpop.f32.mrf.mxu0
  %v794 = vadd.f32 %v613, %v793
  %v795 = vpop.f32.mrf.mxu0
  %v796 = vadd.f32 %v615, %v795
  %797 = vmatprep.mubr.f32.mxu0 0.0
  %v798 = vand.u32 %v79, 4294901760
  %v799 = vsub.f32 %v79, %v798
  %v800 = vand.u32 %v799, 4294901760
  %801 = vmatmul.mubr.f32.gmra.mxu0 %v800
  %v802 = vpop.f32.mrf.mxu0
  %v803 = vadd.f32 %v621, %v802
  %v804 = vpop.f32.mrf.mxu0
  %v805 = vadd.f32 %v623, %v804
  %806 = vmatprep.mubr.f32.mxu0 0.0
  %v807 = vand.u32 %v82, 4294901760
  %v808 = vsub.f32 %v82, %v807
  %v809 = vand.u32 %v808, 4294901760
  %810 = vmatmul.mubr.f32.gmra.mxu0 %v809
  %v811 = vpop.f32.mrf.mxu0
  %v812 = vadd.f32 %v629, %v811
  %v813 = vpop.f32.mrf.mxu0
  %v814 = vadd.f32 %v631, %v813
  %815 = vmatprep.mubr.f32.mxu0 0.0
  %v816 = vand.u32 %v85, 4294901760
  %v817 = vsub.f32 %v85, %v816
  %v818 = vand.u32 %v817, 4294901760
  %819 = vmatmul.mubr.f32.gmra.mxu0 %v818
  %v820 = vpop.f32.mrf.mxu0
  %v821 = vadd.f32 %v637, %v820
  %v822 = vpop.f32.mrf.mxu0
  %v823 = vadd.f32 %v639, %v822
  %824 = vdwg.mxu0
  %825 = vmatprep.subr.mxu0 0.0
  %826 = vmatpush1.msra.mxu0 0.0
  %827 = vmatprep.subr.mxu0 0.0
  %828 = vmatpush1.msra.mxu0 0.0
  %829 = vmatprep.subr.mxu0 0.0
  %830 = vmatpush1.msra.mxu0 0.0
  %831 = vmatprep.subr.mxu0 0.0
  %832 = vmatpush1.msra.mxu0 0.0
  %833 = vmatprep.subr.mxu0 0.0
  %834 = vmatpush1.msra.mxu0 0.0
  %835 = vmatprep.subr.mxu0 0.0
  %836 = vmatpush1.msra.mxu0 0.0
  %837 = vmatprep.subr.mxu0 0.0
  %838 = vmatpush1.msra.mxu0 0.0
  %839 = vmatprep.subr.mxu0 0.0
  %840 = vmatpush1.msra.mxu0 0.0
  %841 = vmatprep.subr.mxu0 0.0
  %842 = vmatpush1.msra.mxu0 0.0
  %843 = vmatprep.subr.mxu0 0.0
  %844 = vmatpush1.msra.mxu0 0.0
  %845 = vmatprep.subr.mxu0 0.0
  %846 = vmatpush1.msra.mxu0 0.0
  %847 = vmatprep.subr.mxu0 0.0
  %848 = vmatpush1.msra.mxu0 0.0
  %849 = vmatprep.subr.mxu0 0.0
  %850 = vmatpush1.msra.mxu0 0.0
  %851 = vmatprep.subr.mxu0 0.0
  %852 = vmatpush1.msra.mxu0 0.0
  %853 = vmatprep.subr.mxu0 0.0
  %854 = vmatpush1.msra.mxu0 0.0
  %v855 = vand.u32 %v90, 4294901760
  %v856 = vsub.f32 %v90, %v855
  %v857 = vand.u32 %v856, 4294901760
  %858 = vmatprep.subr.mxu0 %v857
  %v859 = vand.u32 %v88, 4294901760
  %v860 = vsub.f32 %v88, %v859
  %v861 = vand.u32 %v860, 4294901760
  %862 = vmatpush1.msra.mxu0 %v861
  %863 = vmatprep.subr.mxu0 0.0
  %864 = vmatpush2.msra.mxu0 0.0
  %865 = vmatprep.subr.mxu0 0.0
  %866 = vmatpush2.msra.mxu0 0.0
  %867 = vmatprep.subr.mxu0 0.0
  %868 = vmatpush2.msra.mxu0 0.0
  %869 = vmatprep.subr.mxu0 0.0
  %870 = vmatpush2.msra.mxu0 0.0
  %871 = vmatprep.subr.mxu0 0.0
  %872 = vmatpush2.msra.mxu0 0.0
  %873 = vmatprep.subr.mxu0 0.0
  %874 = vmatpush2.msra.mxu0 0.0
  %875 = vmatprep.subr.mxu0 0.0
  %876 = vmatpush2.msra.mxu0 0.0
  %877 = vmatprep.subr.mxu0 0.0
  %878 = vmatpush2.msra.mxu0 0.0
  %879 = vmatprep.subr.mxu0 0.0
  %880 = vmatpush2.msra.mxu0 0.0
  %881 = vmatprep.subr.mxu0 0.0
  %882 = vmatpush2.msra.mxu0 0.0
  %883 = vmatprep.subr.mxu0 0.0
  %884 = vmatpush2.msra.mxu0 0.0
  %885 = vmatprep.subr.mxu0 0.0
  %886 = vmatpush2.msra.mxu0 0.0
  %887 = vmatprep.subr.mxu0 0.0
  %888 = vmatpush2.msra.mxu0 0.0
  %889 = vmatprep.subr.mxu0 0.0
  %890 = vmatpush2.msra.mxu0 0.0
  %891 = vmatprep.subr.mxu0 0.0
  %892 = vmatpush2.msra.mxu0 0.0
  %893 = vmatprep.subr.mxu0 0.0
  %894 = vmatpush2.msra.mxu0 0.0
  %895 = vmatprep.mubr.f32.mxu0 0.0
  %v896 = vand.u32 %v49, 4294901760
  %897 = vmatmul.mubr.f32.gmra.mxu0 %v896
  %v898 = vpop.f32.mrf.mxu0
  %v899 = vadd.f32 %v713, %v898
  %v900 = vpop.f32.mrf.mxu0
  %v901 = vadd.f32 %v715, %v900
  %902 = vmatprep.mubr.f32.mxu0 0.0
  %v903 = vand.u32 %v52, 4294901760
  %904 = vmatmul.mubr.f32.gmra.mxu0 %v903
  %v905 = vpop.f32.mrf.mxu0
  %v906 = vadd.f32 %v722, %v905
  %v907 = vpop.f32.mrf.mxu0
  %v908 = vadd.f32 %v724, %v907
  %909 = vmatprep.mubr.f32.mxu0 0.0
  %v910 = vand.u32 %v55, 4294901760
  %911 = vmatmul.mubr.f32.gmra.mxu0 %v910
  %v912 = vpop.f32.mrf.mxu0
  %v913 = vadd.f32 %v731, %v912
  %v914 = vpop.f32.mrf.mxu0
  %v915 = vadd.f32 %v733, %v914
  %916 = vmatprep.mubr.f32.mxu0 0.0
  %v917 = vand.u32 %v58, 4294901760
  %918 = vmatmul.mubr.f32.gmra.mxu0 %v917
  %v919 = vpop.f32.mrf.mxu0
  %v920 = vadd.f32 %v740, %v919
  %v921 = vpop.f32.mrf.mxu0
  %v922 = vadd.f32 %v742, %v921
  %923 = vmatprep.mubr.f32.mxu0 0.0
  %v924 = vand.u32 %v61, 4294901760
  %925 = vmatmul.mubr.f32.gmra.mxu0 %v924
  %v926 = vpop.f32.mrf.mxu0
  %v927 = vadd.f32 %v749, %v926
  %v928 = vpop.f32.mrf.mxu0
  %v929 = vadd.f32 %v751, %v928
  %930 = vmatprep.mubr.f32.mxu0 0.0
  %v931 = vand.u32 %v64, 4294901760
  %932 = vmatmul.mubr.f32.gmra.mxu0 %v931
  %v933 = vpop.f32.mrf.mxu0
  %v934 = vadd.f32 %v758, %v933
  %v935 = vpop.f32.mrf.mxu0
  %v936 = vadd.f32 %v760, %v935
  %937 = vmatprep.mubr.f32.mxu0 0.0
  %v938 = vand.u32 %v67, 4294901760
  %939 = vmatmul.mubr.f32.gmra.mxu0 %v938
  %v940 = vpop.f32.mrf.mxu0
  %v941 = vadd.f32 %v767, %v940
  %v942 = vpop.f32.mrf.mxu0
  %v943 = vadd.f32 %v769, %v942
  %944 = vmatprep.mubr.f32.mxu0 0.0
  %v945 = vand.u32 %v70, 4294901760
  %946 = vmatmul.mubr.f32.gmra.mxu0 %v945
  %v947 = vpop.f32.mrf.mxu0
  %v948 = vadd.f32 %v776, %v947
  %v949 = vpop.f32.mrf.mxu0
  %v950 = vadd.f32 %v778, %v949
  %951 = vmatprep.mubr.f32.mxu0 0.0
  %v952 = vand.u32 %v73, 4294901760
  %953 = vmatmul.mubr.f32.gmra.mxu0 %v952
  %v954 = vpop.f32.mrf.mxu0
  %v955 = vadd.f32 %v785, %v954
  %v956 = vpop.f32.mrf.mxu0
  %v957 = vadd.f32 %v787, %v956
  %958 = vmatprep.mubr.f32.mxu0 0.0
  %v959 = vand.u32 %v76, 4294901760
  %960 = vmatmul.mubr.f32.gmra.mxu0 %v959
  %v961 = vpop.f32.mrf.mxu0
  %v962 = vadd.f32 %v794, %v961
  %v963 = vpop.f32.mrf.mxu0
  %v964 = vadd.f32 %v796, %v963
  %965 = vmatprep.mubr.f32.mxu0 0.0
  %v966 = vand.u32 %v79, 4294901760
  %967 = vmatmul.mubr.f32.gmra.mxu0 %v966
  %v968 = vpop.f32.mrf.mxu0
  %v969 = vadd.f32 %v803, %v968
  %v970 = vpop.f32.mrf.mxu0
  %v971 = vadd.f32 %v805, %v970
  %972 = vmatprep.mubr.f32.mxu0 0.0
  %v973 = vand.u32 %v82, 4294901760
  %974 = vmatmul.mubr.f32.gmra.mxu0 %v973
  %v975 = vpop.f32.mrf.mxu0
  %v976 = vadd.f32 %v812, %v975
  %v977 = vpop.f32.mrf.mxu0
  %v978 = vadd.f32 %v814, %v977
  %979 = vmatprep.mubr.f32.mxu0 0.0
  %v980 = vand.u32 %v85, 4294901760
  %981 = vmatmul.mubr.f32.gmra.mxu0 %v980
  %v982 = vpop.f32.mrf.mxu0
  %v983 = vadd.f32 %v821, %v982
  %v984 = vpop.f32.mrf.mxu0
  %v985 = vadd.f32 %v823, %v984
  %986 = vdwg.mxu0
  %987 = vmatprep.subr.mxu0 0.0
  %988 = vmatpush1.msra.mxu0 0.0
  %989 = vmatprep.subr.mxu0 0.0
  %990 = vmatpush1.msra.mxu0 0.0
  %991 = vmatprep.subr.mxu0 0.0
  %992 = vmatpush1.msra.mxu0 0.0
  %993 = vmatprep.subr.mxu0 0.0
  %994 = vmatpush1.msra.mxu0 0.0
  %995 = vmatprep.subr.mxu0 0.0
  %996 = vmatpush1.msra.mxu0 0.0
  %997 = vmatprep.subr.mxu0 0.0
  %998 = vmatpush1.msra.mxu0 0.0
  %999 = vmatprep.subr.mxu0 0.0
  %1000 = vmatpush1.msra.mxu0 0.0
  %1001 = vmatprep.subr.mxu0 0.0
  %1002 = vmatpush1.msra.mxu0 0.0
  %1003 = vmatprep.subr.mxu0 0.0
  %1004 = vmatpush1.msra.mxu0 0.0
  %1005 = vmatprep.subr.mxu0 0.0
  %1006 = vmatpush1.msra.mxu0 0.0
  %1007 = vmatprep.subr.mxu0 0.0
  %1008 = vmatpush1.msra.mxu0 0.0
  %1009 = vmatprep.subr.mxu0 0.0
  %1010 = vmatpush1.msra.mxu0 0.0
  %1011 = vmatprep.subr.mxu0 0.0
  %1012 = vmatpush1.msra.mxu0 0.0
  %1013 = vmatprep.subr.mxu0 0.0
  %1014 = vmatpush1.msra.mxu0 0.0
  %1015 = vmatprep.subr.mxu0 0.0
  %1016 = vmatpush1.msra.mxu0 0.0
  %v1017 = vand.u32 %v90, 4294901760
  %1018 = vmatprep.subr.mxu0 %v1017
  %v1019 = vand.u32 %v88, 4294901760
  %1020 = vmatpush1.msra.mxu0 %v1019
  %1021 = vmatprep.subr.mxu0 0.0
  %1022 = vmatpush2.msra.mxu0 0.0
  %1023 = vmatprep.subr.mxu0 0.0
  %1024 = vmatpush2.msra.mxu0 0.0
  %1025 = vmatprep.subr.mxu0 0.0
  %1026 = vmatpush2.msra.mxu0 0.0
  %1027 = vmatprep.subr.mxu0 0.0
  %1028 = vmatpush2.msra.mxu0 0.0
  %1029 = vmatprep.subr.mxu0 0.0
  %1030 = vmatpush2.msra.mxu0 0.0
  %1031 = vmatprep.subr.mxu0 0.0
  %1032 = vmatpush2.msra.mxu0 0.0
  %1033 = vmatprep.subr.mxu0 0.0
  %1034 = vmatpush2.msra.mxu0 0.0
  %1035 = vmatprep.subr.mxu0 0.0
  %1036 = vmatpush2.msra.mxu0 0.0
  %1037 = vmatprep.subr.mxu0 0.0
  %1038 = vmatpush2.msra.mxu0 0.0
  %1039 = vmatprep.subr.mxu0 0.0
  %1040 = vmatpush2.msra.mxu0 0.0
  %1041 = vmatprep.subr.mxu0 0.0
  %1042 = vmatpush2.msra.mxu0 0.0
  %1043 = vmatprep.subr.mxu0 0.0
  %1044 = vmatpush2.msra.mxu0 0.0
  %1045 = vmatprep.subr.mxu0 0.0
  %1046 = vmatpush2.msra.mxu0 0.0
  %1047 = vmatprep.subr.mxu0 0.0
  %1048 = vmatpush2.msra.mxu0 0.0
  %1049 = vmatprep.subr.mxu0 0.0
  %1050 = vmatpush2.msra.mxu0 0.0
  %1051 = vmatprep.subr.mxu0 0.0
  %1052 = vmatpush2.msra.mxu0 0.0
  %1053 = vmatprep.mubr.f32.mxu0 0.0
  %v1054 = vand.u32 %v49, 4294901760
  %1055 = vmatmul.mubr.f32.gmra.mxu0 %v1054
  %v1056 = vpop.f32.mrf.mxu0
  %v1057 = vadd.f32 %v899, %v1056
  %v1058 = vpop.f32.mrf.mxu0
  %v1059 = vadd.f32 %v901, %v1058
  %1060 = vmatprep.mubr.f32.mxu0 0.0
  %v1061 = vand.u32 %v52, 4294901760
  %1062 = vmatmul.mubr.f32.gmra.mxu0 %v1061
  %v1063 = vpop.f32.mrf.mxu0
  %v1064 = vadd.f32 %v906, %v1063
  %v1065 = vpop.f32.mrf.mxu0
  %v1066 = vadd.f32 %v908, %v1065
  %1067 = vmatprep.mubr.f32.mxu0 0.0
  %v1068 = vand.u32 %v55, 4294901760
  %1069 = vmatmul.mubr.f32.gmra.mxu0 %v1068
  %v1070 = vpop.f32.mrf.mxu0
  %v1071 = vadd.f32 %v913, %v1070
  %v1072 = vpop.f32.mrf.mxu0
  %v1073 = vadd.f32 %v915, %v1072
  %1074 = vmatprep.mubr.f32.mxu0 0.0
  %v1075 = vand.u32 %v58, 4294901760
  %1076 = vmatmul.mubr.f32.gmra.mxu0 %v1075
  %v1077 = vpop.f32.mrf.mxu0
  %v1078 = vadd.f32 %v920, %v1077
  %v1079 = vpop.f32.mrf.mxu0
  %v1080 = vadd.f32 %v922, %v1079
  %1081 = vmatprep.mubr.f32.mxu0 0.0
  %v1082 = vand.u32 %v61, 4294901760
  %1083 = vmatmul.mubr.f32.gmra.mxu0 %v1082
  %v1084 = vpop.f32.mrf.mxu0
  %v1085 = vadd.f32 %v927, %v1084
  %v1086 = vpop.f32.mrf.mxu0
  %v1087 = vadd.f32 %v929, %v1086
  %1088 = vmatprep.mubr.f32.mxu0 0.0
  %v1089 = vand.u32 %v64, 4294901760
  %1090 = vmatmul.mubr.f32.gmra.mxu0 %v1089
  %v1091 = vpop.f32.mrf.mxu0
  %v1092 = vadd.f32 %v934, %v1091
  %v1093 = vpop.f32.mrf.mxu0
  %v1094 = vadd.f32 %v936, %v1093
  %1095 = vmatprep.mubr.f32.mxu0 0.0
  %v1096 = vand.u32 %v67, 4294901760
  %1097 = vmatmul.mubr.f32.gmra.mxu0 %v1096
  %v1098 = vpop.f32.mrf.mxu0
  %v1099 = vadd.f32 %v941, %v1098
  %v1100 = vpop.f32.mrf.mxu0
  %v1101 = vadd.f32 %v943, %v1100
  %1102 = vmatprep.mubr.f32.mxu0 0.0
  %v1103 = vand.u32 %v70, 4294901760
  %1104 = vmatmul.mubr.f32.gmra.mxu0 %v1103
  %v1105 = vpop.f32.mrf.mxu0
  %v1106 = vadd.f32 %v948, %v1105
  %v1107 = vpop.f32.mrf.mxu0
  %v1108 = vadd.f32 %v950, %v1107
  %1109 = vmatprep.mubr.f32.mxu0 0.0
  %v1110 = vand.u32 %v73, 4294901760
  %1111 = vmatmul.mubr.f32.gmra.mxu0 %v1110
  %v1112 = vpop.f32.mrf.mxu0
  %v1113 = vadd.f32 %v955, %v1112
  %v1114 = vpop.f32.mrf.mxu0
  %v1115 = vadd.f32 %v957, %v1114
  %1116 = vmatprep.mubr.f32.mxu0 0.0
  %v1117 = vand.u32 %v76, 4294901760
  %1118 = vmatmul.mubr.f32.gmra.mxu0 %v1117
  %v1119 = vpop.f32.mrf.mxu0
  %v1120 = vadd.f32 %v962, %v1119
  %v1121 = vpop.f32.mrf.mxu0
  %v1122 = vadd.f32 %v964, %v1121
  %1123 = vmatprep.mubr.f32.mxu0 0.0
  %v1124 = vand.u32 %v79, 4294901760
  %1125 = vmatmul.mubr.f32.gmra.mxu0 %v1124
  %v1126 = vpop.f32.mrf.mxu0
  %v1127 = vadd.f32 %v969, %v1126
  %v1128 = vpop.f32.mrf.mxu0
  %v1129 = vadd.f32 %v971, %v1128
  %1130 = vmatprep.mubr.f32.mxu0 0.0
  %v1131 = vand.u32 %v82, 4294901760
  %1132 = vmatmul.mubr.f32.gmra.mxu0 %v1131
  %v1133 = vpop.f32.mrf.mxu0
  %v1134 = vadd.f32 %v976, %v1133
  %v1135 = vpop.f32.mrf.mxu0
  %v1136 = vadd.f32 %v978, %v1135
  %1137 = vmatprep.mubr.f32.mxu0 0.0
  %v1138 = vand.u32 %v85, 4294901760
  %1139 = vmatmul.mubr.f32.gmra.mxu0 %v1138
  %v1140 = vpop.f32.mrf.mxu0
  %v1141 = vadd.f32 %v983, %v1140
  %v1142 = vpop.f32.mrf.mxu0
  %v1143 = vadd.f32 %v985, %v1142
  %1144 = vdwg.mxu0
  %v1145 = vld [vmem:[#allocation2] sm:$0xff]
  %v1146 = vld [vmem:[#allocation2 + $0x8] sm:$0xff]
  %v1147 = vld [vmem:[#allocation2 + $0x10] sm:$0xff]
  %v1148 = vld [vmem:[#allocation2 + $0x18] sm:$0xff]
  %v1149 = vld [vmem:[#allocation2 + $0x20] sm:$0xff]
  %v1150 = vld [vmem:[#allocation2 + $0x28] sm:$0xff]
  %v1151 = vld [vmem:[#allocation2 + $0x30] sm:$0xff]
  %v1152 = vld [vmem:[#allocation2 + $0x38] sm:$0xff]
  %v1153 = vld [vmem:[#allocation2 + $0x40] sm:$0xff]
  %v1154 = vld [vmem:[#allocation2 + $0x48] sm:$0xff]
  %v1155 = vld [vmem:[#allocation2 + $0x50] sm:$0xff]
  %v1156 = vld [vmem:[#allocation2 + $0x58] sm:$0xff]
  %v1157 = vld [vmem:[#allocation2 + $0x60] sm:$0xff]
  %v1158 = vmin.f32 %v1145, %v1057
  %v1159 = vmin.f32 %v1146, %v1064
  %v1160 = vmin.f32 %v1147, %v1071
  %v1161 = vmin.f32 %v1148, %v1078
  %v1162 = vmin.f32 %v1149, %v1085
  %v1163 = vmin.f32 %v1150, %v1092
  %v1164 = vmin.f32 %v1151, %v1099
  %v1165 = vmin.f32 %v1152, %v1106
  %v1166 = vmin.f32 %v1153, %v1113
  %v1167 = vmin.f32 %v1154, %v1120
  %v1168 = vmin.f32 %v1155, %v1127
  %v1169 = vmin.f32 %v1156, %v1134
  %v1170 = vmin.f32 %v1157, %v1141
  %v1171 = vmin.f32 %v1158, %v1059
  %v1172 = vmin.f32 %v1159, %v1066
  %v1173 = vmin.f32 %v1160, %v1073
  %v1174 = vmin.f32 %v1161, %v1080
  %v1175 = vmin.f32 %v1162, %v1087
  %v1176 = vmin.f32 %v1163, %v1094
  %v1177 = vmin.f32 %v1164, %v1101
  %v1178 = vmin.f32 %v1165, %v1108
  %v1179 = vmin.f32 %v1166, %v1115
  %v1180 = vmin.f32 %v1167, %v1122
  %v1181 = vmin.f32 %v1168, %v1129
  %v1182 = vmin.f32 %v1169, %v1136
  %v1183 = vmin.f32 %v1170, %v1143
  %1184 = vst [vmem:[#allocation2] sm:$0xff] %v1171
  %1185 = vst [vmem:[#allocation2 + $0x8] sm:$0xff] %v1172
  %1186 = vst [vmem:[#allocation2 + $0x10] sm:$0xff] %v1173
  %1187 = vst [vmem:[#allocation2 + $0x18] sm:$0xff] %v1174
  %1188 = vst [vmem:[#allocation2 + $0x20] sm:$0xff] %v1175
  %1189 = vst [vmem:[#allocation2 + $0x28] sm:$0xff] %v1176
  %1190 = vst [vmem:[#allocation2 + $0x30] sm:$0xff] %v1177
  %1191 = vst [vmem:[#allocation2 + $0x38] sm:$0xff] %v1178
  %1192 = vst [vmem:[#allocation2 + $0x40] sm:$0xff] %v1179
  %1193 = vst [vmem:[#allocation2 + $0x48] sm:$0xff] %v1180
  %1194 = vst [vmem:[#allocation2 + $0x50] sm:$0xff] %v1181
  %1195 = vst [vmem:[#allocation2 + $0x58] sm:$0xff] %v1182
  %1196 = vst [vmem:[#allocation2 + $0x60] sm:$0xff] %v1183
  // Predicated region
  $region18: #{tpu_custom_call.1} parent=0 // pred_check
    %p1197 = pneg %p14
  $region19: #{tpu_custom_call.1} parent=0 // pred_check_branch
    %1199 = sbr.rel (%p1197) target = $region21
  $region20: #{tpu_custom_call.1} parent=0 // pred_region
    %v1200 = vld [vmem:[#allocation2] sm:$0xff]
    %v1201 = vld [vmem:[#allocation2 + $0x8] sm:$0xff]
    %v1202 = vld [vmem:[#allocation2 + $0x10] sm:$0xff]
    %v1203 = vld [vmem:[#allocation2 + $0x18] sm:$0xff]
    %v1204 = vld [vmem:[#allocation2 + $0x20] sm:$0xff]
    %v1205 = vld [vmem:[#allocation2 + $0x28] sm:$0xff]
    %v1206 = vld [vmem:[#allocation2 + $0x30] sm:$0xff]
    %v1207 = vld [vmem:[#allocation2 + $0x38] sm:$0xff]
    %v1208 = vld [vmem:[#allocation2 + $0x40] sm:$0xff]
    %v1209 = vld [vmem:[#allocation2 + $0x48] sm:$0xff]
    %v1210 = vld [vmem:[#allocation2 + $0x50] sm:$0xff]
    %v1211 = vld [vmem:[#allocation2 + $0x58] sm:$0xff]
    %v1212 = vld [vmem:[#allocation2 + $0x60] sm:$0xff]
    %1213 = vmin.xlane.f32.xlu0 %v1200
    %v1214 = vpop.xlane.xlu0 %1213
    %1215 = vmin.xlane.f32.xlu0 %v1201
    %v1216 = vpop.xlane.xlu0 %1215
    %1217 = vmin.xlane.f32.xlu0 %v1202
    %v1218 = vpop.xlane.xlu0 %1217
    %1219 = vmin.xlane.f32.xlu0 %v1203
    %v1220 = vpop.xlane.xlu0 %1219
    %1221 = vmin.xlane.f32.xlu0 %v1204
    %v1222 = vpop.xlane.xlu0 %1221
    %1223 = vmin.xlane.f32.xlu0 %v1205
    %v1224 = vpop.xlane.xlu0 %1223
    %1225 = vmin.xlane.f32.xlu0 %v1206
    %v1226 = vpop.xlane.xlu0 %1225
    %1227 = vmin.xlane.f32.xlu0 %v1207
    %v1228 = vpop.xlane.xlu0 %1227
    %1229 = vmin.xlane.f32.xlu0 %v1208
    %v1230 = vpop.xlane.xlu0 %1229
    %1231 = vmin.xlane.f32.xlu0 %v1209
    %v1232 = vpop.xlane.xlu0 %1231
    %1233 = vmin.xlane.f32.xlu0 %v1210
    %v1234 = vpop.xlane.xlu0 %1233
    %1235 = vmin.xlane.f32.xlu0 %v1211
    %v1236 = vpop.xlane.xlu0 %1235
    %1237 = vmin.xlane.f32.xlu0 %v1212
    %v1238 = vpop.xlane.xlu0 %1237
    %v1239 = vld [vmem:[%s1] sm:$0xff]
    %v1240 = vld [vmem:[%s1 + $0x8] sm:$0xff]
    %v1241 = vld [vmem:[%s1 + $0x10] sm:$0xff]
    %v1242 = vld [vmem:[%s1 + $0x18] sm:$0xff]
    %v1243 = vld [vmem:[%s1 + $0x20] sm:$0xff]
    %v1244 = vld [vmem:[%s1 + $0x28] sm:$0xff]
    %v1245 = vld [vmem:[%s1 + $0x30] sm:$0xff]
    %v1246 = vld [vmem:[%s1 + $0x38] sm:$0xff]
    %v1247 = vld [vmem:[%s1 + $0x40] sm:$0xff]
    %v1248 = vld [vmem:[%s1 + $0x48] sm:$0xff]
    %v1249 = vld [vmem:[%s1 + $0x50] sm:$0xff]
    %v1250 = vld [vmem:[%s1 + $0x58] sm:$0xff]
    %v1251 = vld [vmem:[%s1 + $0x60] sm:$0xff]
    %v1252 = vadd.f32 %v1214, %v1239
    %v1253 = vadd.f32 %v1216, %v1240
    %v1254 = vadd.f32 %v1218, %v1241
    %v1255 = vadd.f32 %v1220, %v1242
    %v1256 = vadd.f32 %v1222, %v1243
    %v1257 = vadd.f32 %v1224, %v1244
    %v1258 = vadd.f32 %v1226, %v1245
    %v1259 = vadd.f32 %v1228, %v1246
    %v1260 = vadd.f32 %v1230, %v1247
    %v1261 = vadd.f32 %v1232, %v1248
    %v1262 = vadd.f32 %v1234, %v1249
    %v1263 = vadd.f32 %v1236, %v1250
    %v1264 = vadd.f32 %v1238, %v1251
    %v1265 = vmax.f32 %v1252, 0.0
    %v1266 = vmax.f32 %v1253, 0.0
    %v1267 = vmax.f32 %v1254, 0.0
    %v1268 = vmax.f32 %v1255, 0.0
    %v1269 = vmax.f32 %v1256, 0.0
    %v1270 = vmax.f32 %v1257, 0.0
    %v1271 = vmax.f32 %v1258, 0.0
    %v1272 = vmax.f32 %v1259, 0.0
    %v1273 = vmax.f32 %v1260, 0.0
    %v1274 = vmax.f32 %v1261, 0.0
    %v1275 = vmax.f32 %v1262, 0.0
    %v1276 = vmax.f32 %v1263, 0.0
    %v1277 = vmax.f32 %v1264, 0.0
    %v1278 = vrsqrt.pop %v1265
    %v1279 = vmul.f32 %v1265, %v1278
    %vm1280 = vcmp.eq.f32.partialorder %v1265, inf
    %v1281 = vsel %vm1280, %v1265, %v1279
    %vm1282 = vcmp.eq.f32.partialorder %v1265, 0.0
    %v1283 = vand.u32 %v1265, 2147483648
    %v1284 = vsel %vm1282, %v1283, %v1281
    %v1285 = vrsqrt.pop %v1266
    %v1286 = vmul.f32 %v1266, %v1285
    %vm1287 = vcmp.eq.f32.partialorder %v1266, inf
    %v1288 = vsel %vm1287, %v1266, %v1286
    %vm1289 = vcmp.eq.f32.partialorder %v1266, 0.0
    %v1290 = vand.u32 %v1266, 2147483648
    %v1291 = vsel %vm1289, %v1290, %v1288
    %v1292 = vrsqrt.pop %v1267
    %v1293 = vmul.f32 %v1267, %v1292
    %vm1294 = vcmp.eq.f32.partialorder %v1267, inf
    %v1295 = vsel %vm1294, %v1267, %v1293
    %vm1296 = vcmp.eq.f32.partialorder %v1267, 0.0
    %v1297 = vand.u32 %v1267, 2147483648
    %v1298 = vsel %vm1296, %v1297, %v1295
    %v1299 = vrsqrt.pop %v1268
    %v1300 = vmul.f32 %v1268, %v1299
    %vm1301 = vcmp.eq.f32.partialorder %v1268, inf
    %v1302 = vsel %vm1301, %v1268, %v1300
    %vm1303 = vcmp.eq.f32.partialorder %v1268, 0.0
    %v1304 = vand.u32 %v1268, 2147483648
    %v1305 = vsel %vm1303, %v1304, %v1302
    %v1306 = vrsqrt.pop %v1269
    %v1307 = vmul.f32 %v1269, %v1306
    %vm1308 = vcmp.eq.f32.partialorder %v1269, inf
    %v1309 = vsel %vm1308, %v1269, %v1307
    %vm1310 = vcmp.eq.f32.partialorder %v1269, 0.0
    %v1311 = vand.u32 %v1269, 2147483648
    %v1312 = vsel %vm1310, %v1311, %v1309
    %v1313 = vrsqrt.pop %v1270
    %v1314 = vmul.f32 %v1270, %v1313
    %vm1315 = vcmp.eq.f32.partialorder %v1270, inf
    %v1316 = vsel %vm1315, %v1270, %v1314
    %vm1317 = vcmp.eq.f32.partialorder %v1270, 0.0
    %v1318 = vand.u32 %v1270, 2147483648
    %v1319 = vsel %vm1317, %v1318, %v1316
    %v1320 = vrsqrt.pop %v1271
    %v1321 = vmul.f32 %v1271, %v1320
    %vm1322 = vcmp.eq.f32.partialorder %v1271, inf
    %v1323 = vsel %vm1322, %v1271, %v1321
    %vm1324 = vcmp.eq.f32.partialorder %v1271, 0.0
    %v1325 = vand.u32 %v1271, 2147483648
    %v1326 = vsel %vm1324, %v1325, %v1323
    %v1327 = vrsqrt.pop %v1272
    %v1328 = vmul.f32 %v1272, %v1327
    %vm1329 = vcmp.eq.f32.partialorder %v1272, inf
    %v1330 = vsel %vm1329, %v1272, %v1328
    %vm1331 = vcmp.eq.f32.partialorder %v1272, 0.0
    %v1332 = vand.u32 %v1272, 2147483648
    %v1333 = vsel %vm1331, %v1332, %v1330
    %v1334 = vrsqrt.pop %v1273
    %v1335 = vmul.f32 %v1273, %v1334
    %vm1336 = vcmp.eq.f32.partialorder %v1273, inf
    %v1337 = vsel %vm1336, %v1273, %v1335
    %vm1338 = vcmp.eq.f32.partialorder %v1273, 0.0
    %v1339 = vand.u32 %v1273, 2147483648
    %v1340 = vsel %vm1338, %v1339, %v1337
    %v1341 = vrsqrt.pop %v1274
    %v1342 = vmul.f32 %v1274, %v1341
    %vm1343 = vcmp.eq.f32.partialorder %v1274, inf
    %v1344 = vsel %vm1343, %v1274, %v1342
    %vm1345 = vcmp.eq.f32.partialorder %v1274, 0.0
    %v1346 = vand.u32 %v1274, 2147483648
    %v1347 = vsel %vm1345, %v1346, %v1344
    %v1348 = vrsqrt.pop %v1275
    %v1349 = vmul.f32 %v1275, %v1348
    %vm1350 = vcmp.eq.f32.partialorder %v1275, inf
    %v1351 = vsel %vm1350, %v1275, %v1349
    %vm1352 = vcmp.eq.f32.partialorder %v1275, 0.0
    %v1353 = vand.u32 %v1275, 2147483648
    %v1354 = vsel %vm1352, %v1353, %v1351
    %v1355 = vrsqrt.pop %v1276
    %v1356 = vmul.f32 %v1276, %v1355
    %vm1357 = vcmp.eq.f32.partialorder %v1276, inf
    %v1358 = vsel %vm1357, %v1276, %v1356
    %vm1359 = vcmp.eq.f32.partialorder %v1276, 0.0
    %v1360 = vand.u32 %v1276, 2147483648
    %v1361 = vsel %vm1359, %v1360, %v1358
    %v1362 = vrsqrt.pop %v1277
    %v1363 = vmul.f32 %v1277, %v1362
    %vm1364 = vcmp.eq.f32.partialorder %v1277, inf
    %v1365 = vsel %vm1364, %v1277, %v1363
    %vm1366 = vcmp.eq.f32.partialorder %v1277, 0.0
    %v1367 = vand.u32 %v1277, 2147483648
    %v1368 = vsel %vm1366, %v1367, %v1365
    %vm1369 = vcmask 7168
    %1370 = vst.msk [vmem:[%s3] sm:$0xff] %vm1369, %v1284
    %1371 = vst.msk [vmem:[%s3 + $0x8] sm:$0xff] %vm1369, %v1291
    %1372 = vst.msk [vmem:[%s3 + $0x10] sm:$0xff] %vm1369, %v1298
    %1373 = vst.msk [vmem:[%s3 + $0x18] sm:$0xff] %vm1369, %v1305
    %1374 = vst.msk [vmem:[%s3 + $0x20] sm:$0xff] %vm1369, %v1312
    %1375 = vst.msk [vmem:[%s3 + $0x28] sm:$0xff] %vm1369, %v1319
    %1376 = vst.msk [vmem:[%s3 + $0x30] sm:$0xff] %vm1369, %v1326
    %1377 = vst.msk [vmem:[%s3 + $0x38] sm:$0xff] %vm1369, %v1333
    %1378 = vst.msk [vmem:[%s3 + $0x40] sm:$0xff] %vm1369, %v1340
    %1379 = vst.msk [vmem:[%s3 + $0x48] sm:$0xff] %vm1369, %v1347
    %1380 = vst.msk [vmem:[%s3 + $0x50] sm:$0xff] %vm1369, %v1354
    %1381 = vst.msk [vmem:[%s3 + $0x58] sm:$0xff] %vm1369, %v1361
    %1382 = vst.msk [vmem:[%s3 + $0x60] sm:$0xff] %vm1369, %v1368
  $region21: #{tpu_custom_call.1} parent=0 // pred_fallthru
    _
  // Predicated region
  $region22: #{tpu_custom_call.1} parent=0 // pred_check
    _
  $region23: #{tpu_custom_call.1} parent=0 // pred_check_branch
    %1384 = sbr.rel (0) target = $region25
  $region24: #{tpu_custom_call.1} parent=0 // pred_region
    _
  $region25: #{tpu_custom_call.1} parent=0 // pred_fallthru
    _
  // Predicated region
  $region26: #{tpu_custom_call.1} parent=0 // pred_check
    _
  $region27: #{tpu_custom_call.1} parent=0 // pred_check_branch
    %1386 = sbr.rel (0) target = $region29
  $region28: #{tpu_custom_call.1} parent=0 // pred_region
    _
  $region29: #{tpu_custom_call.1} parent=0 // pred_fallthru
    _

</llo_original>
